<compile_context>
chip_gen: v6e
topology: v6e:2x2x1
jax: 0.10.0
libtpu: 0.0.40
codegen_flags: <defaults>
</compile_context>

<pallas_src>
import jax
import jax.numpy as jnp
from jax.experimental import pallas as pl
from jax.experimental.pallas import tpu as pltpu


_MAX_TILE_COLS = 64 * 1024    # 512K batch elements / step -> ~12 MiB double-buffered
_MIN_GRID_STEPS = 2           # let both v7x TensorCores get work


def _round_up(n: int, m: int) -> int:
    return ((n + m - 1) // m) * m


def _choose_tile_cols(n_cols: int, max_tile_cols: int) -> int:
    """Pick a tile width (multiple of 128) that divides n_cols, is
    <= max_tile_cols, and leaves >= _MIN_GRID_STEPS grid steps when possible."""
    assert n_cols % 128 == 0
    n_units = n_cols // 128
    target = min(max(1, max_tile_cols // 128), n_units)
    if n_units >= _MIN_GRID_STEPS:
        target = min(target, max(1, n_units // _MIN_GRID_STEPS))
    tile_units = max(d for d in range(1, target + 1) if n_units % d == 0)
    return tile_units * 128


def simplenet_kernel(w_ref, b_ref, x_ref, o_ref):
    # w_ref: (in_f,) f32 in SMEM; b_ref: (1,) f32 in SMEM
    # x_ref: (in_f*8, TILE_C) f32 in VMEM -- rows [8f, 8f+8) are feature f's
    #        slab of 8 sublanes; o_ref: (8, TILE_C) f32 in VMEM.
    x = jnp.maximum(x_ref[...], 0.0)                 # ReLU, dense VPU op
    in_f = x_ref.shape[0] // 8
    # K=2 contraction as scalar-broadcast FMAs: stays on VALU slots, no
    # cross-lane reduction through the XLU, no sub-tile MXU matmul.
    acc = w_ref[0] * x[0:8, :]
    for f in range(1, in_f):
        acc = acc + w_ref[f] * x[8 * f:8 * (f + 1), :]
    o_ref[...] = acc + b_ref[0]


def simplenet_forward_feature_major(xt, weight, bias, *, max_tile_cols=_MAX_TILE_COLS):
    """Fast path.  xt: (in_f, B_pad) f32 feature-major, B_pad % 1024 == 0.
    weight: (1, in_f); bias: (1,).  Returns (B_pad,) f32 (padded lanes = bias)."""
    in_f, B_pad = xt.shape
    out_f, w_in = weight.shape
    assert w_in == in_f and out_f == 1
    assert B_pad % 1024 == 0, "batch must be padded to a multiple of 8*128"

    n_cols = B_pad // 8
    # Free row-major view: feature f's batch row (B_pad,) becomes an 8-sublane
    # slab (8, n_cols); both slabs share the same (row, col) -> batch mapping.
    xr = xt.reshape(in_f * 8, n_cols)

    tile_c = _choose_tile_cols(n_cols, max_tile_cols)
    grid = (n_cols // tile_c,)

    out = pl.pallas_call(
        simplenet_kernel,
        out_shape=jax.ShapeDtypeStruct((8, n_cols), xt.dtype),
        grid=grid,
        in_specs=[
            # 12 bytes of parameters -> SMEM scalars, no per-step VMEM DMA.
            pl.BlockSpec(memory_space=pltpu.MemorySpace.SMEM),   # weight (in_f,)
            pl.BlockSpec(memory_space=pltpu.MemorySpace.SMEM),   # bias   (1,)
            # Fully (8,128)-dense input tile: first dim = in_f*8 (full dim,
            # multiple of 8), last dim a multiple of 128.
            pl.BlockSpec((in_f * 8, tile_c), lambda i: (0, i)),
            # If profiling shows exposed DMA-issue latency, add
            # pipeline_mode=pl.Buffered(3) on this spec (tune last).
        ],
        # Fully dense output tile -> unmasked vst stream.
        out_specs=pl.BlockSpec((8, tile_c), lambda i: (0, i)),
        compiler_params=pltpu.CompilerParams(
            dimension_semantics=("parallel",),       # shard batch tiles across TCs
            vmem_limit_bytes=32 * 1024 * 1024,       # explicit: safe margin on v5e
        ),
    )(weight.reshape(in_f), bias, xr)

    # Row-major flatten restores batch order: out[r, c] -> batch r*n_cols + c.
    return out.reshape(B_pad)


def simplenet_forward(x, weight, bias, *, max_tile_cols=_MAX_TILE_COLS):
    """Compatibility wrapper matching the PyTorch module: x (B, in_f) -> (B, 1).
    NOTE: the transpose/pad here is one extra HBM layout pass; prefer feeding
    feature-major activations to simplenet_forward_feature_major directly."""
    B, in_f = x.shape
    # Pad only to a multiple of 1024 (8 sublanes x 128 lanes), not a whole tile.
    B_pad = _round_up(max(B, 1), 1024)
    xt = jnp.pad(x.T, ((0, 0), (0, B_pad - B)))      # (in_f, B_pad), feature-major
    y = simplenet_forward_feature_major(xt, weight, bias, max_tile_cols=max_tile_cols)
    return y[:B].reshape(B, 1)


if __name__ == "__main__":
    key = jax.random.PRNGKey(0)
    k_w, k_b, k_x = jax.random.split(key, 3)

    in_features, out_features = 2, 1
    # nn.Linear default init: U(-1/sqrt(in), 1/sqrt(in))
    bound = 1.0 / jnp.sqrt(jnp.float32(in_features))
    weight = jax.random.uniform(
        k_w, (out_features, in_features), jnp.float32, -bound, bound
    )
    bias = jax.random.uniform(k_b, (out_features,), jnp.float32, -bound, bound)

    # 1) The exact input from the reference script (batch=2).
    x_small = jnp.array([[1.0, 2.0], [-3.0, -4.0]], dtype=jnp.float32)
    out_small = jax.block_until_ready(simplenet_forward(x_small, weight, bias))
    ref_small = jnp.maximum(x_small, 0.0) @ weight.T + bias
    assert out_small.shape == (2, 1)
    assert jnp.allclose(out_small, ref_small, atol=1e-6), (out_small, ref_small)

    # 2) A batch that exercises multiple grid steps (grid=(3,)) and tail padding.
    x_big = jax.random.normal(k_x, (2500, in_features), jnp.float32)
    out_big = jax.block_until_ready(
        simplenet_forward(x_big, weight, bias, max_tile_cols=128)
    )
    ref_big = jnp.maximum(x_big, 0.0) @ weight.T + bias
    assert out_big.shape == (2500, 1)
    assert jnp.allclose(out_big, ref_big, atol=1e-5)

    print("KERNEL_OK")
</pallas_src>

<mosaic_0001>
module attributes {stable_mosaic.version = 11 : i64} {
  func.func @simplenet_kernel(%arg0: i32, %arg1: memref<2xf32, #tpu.memory_space<smem>>, %arg2: memref<1xf32, #tpu.memory_space<smem>>, %arg3: memref<16x128xf32, #tpu.memory_space<vmem>>, %arg4: memref<8x128xf32, #tpu.memory_space<vmem>>) attributes {dimension_semantics = [#tpu.dimension_semantics<parallel>], iteration_bounds = array<i64: 1>, scalar_prefetch = 0 : i64, scratch_operands = 0 : i64, tpu.core_type = #tpu.core_type<tc>, window_params = [{transform_indices = @transform_0, window_bounds = array<i64: 2>}, {transform_indices = @transform_1, window_bounds = array<i64: 1>}, {transform_indices = @transform_2, window_bounds = array<i64: 16, 128>}, {transform_indices = @transform_3, window_bounds = array<i64: 8, 128>}]} {
    %c0 = arith.constant 0 : index
    %c0_0 = arith.constant 0 : index
    %0 = vector.load %arg3[%c0, %c0_0] : memref<16x128xf32, #tpu.memory_space<vmem>>, vector<16x128xf32>
    %cst = arith.constant 0.000000e+00 : f32
    %1 = vector.broadcast %cst : f32 to vector<16x128xf32>
    %2 = arith.maximumf %0, %1 : vector<16x128xf32>
    %c0_1 = arith.constant 0 : index
    %3 = memref.load %arg1[%c0_1] : memref<2xf32, #tpu.memory_space<smem>>
    %4 = vector.extract_strided_slice %2 {offsets = [0, 0], sizes = [8, 128], strides = [1, 1]} : vector<16x128xf32> to vector<8x128xf32>
    %5 = vector.broadcast %3 : f32 to vector<8x128xf32>
    %6 = arith.mulf %5, %4 : vector<8x128xf32>
    %c1 = arith.constant 1 : index
    %7 = memref.load %arg1[%c1] : memref<2xf32, #tpu.memory_space<smem>>
    %8 = vector.extract_strided_slice %2 {offsets = [8, 0], sizes = [8, 128], strides = [1, 1]} : vector<16x128xf32> to vector<8x128xf32>
    %9 = vector.broadcast %7 : f32 to vector<8x128xf32>
    %10 = arith.mulf %9, %8 : vector<8x128xf32>
    %11 = arith.addf %6, %10 : vector<8x128xf32>
    %c0_2 = arith.constant 0 : index
    %12 = memref.load %arg2[%c0_2] : memref<1xf32, #tpu.memory_space<smem>>
    %13 = vector.broadcast %12 : f32 to vector<8x128xf32>
    %14 = arith.addf %11, %13 : vector<8x128xf32>
    %c0_3 = arith.constant 0 : index
    %c0_4 = arith.constant 0 : index
    %15 = vector.load %arg4[%c0_3, %c0_4] : memref<8x128xf32, #tpu.memory_space<vmem>>, vector<8x128xf32>
    tpu.vector_store %arg4[%c0_3, %c0_4], %14 {strides = array<i32>} : memref<8x128xf32, #tpu.memory_space<vmem>>, vector<8x128xf32>,
    return
  }
  func.func @transform_0(%arg0: i32) -> i32 {
    %c0_i32 = arith.constant 0 : i32
    %c0_i32_0 = arith.constant 0 : i32
    return %c0_i32 : i32
  }
  func.func @transform_1(%arg0: i32) -> i32 {
    %c0_i32 = arith.constant 0 : i32
    %c0_i32_0 = arith.constant 0 : i32
    return %c0_i32 : i32
  }
  func.func @transform_2(%arg0: i32) -> (i32, i32) {
    %c0_i32 = arith.constant 0 : i32
    %c0_i32_0 = arith.constant 0 : i32
    return %c0_i32, %arg0 : i32, i32
  }
  func.func @transform_3(%arg0: i32) -> (i32, i32) {
    %c0_i32 = arith.constant 0 : i32
    %c0_i32_0 = arith.constant 0 : i32
    return %c0_i32, %arg0 : i32, i32
  }
}

</mosaic_0001>

<llo_original>
// kernel: tpu_custom_call.1
$region0: #{tpu_custom_call.1}
  #allocation0 [shape = 'u32[]', space=smem, size = 0x4, offset = 0x4, fixed_abs, tag = 'smem constant byte address 0x4 - core index']
  #allocation1 [shape = 'u32[144,128]{1,0:T(1,128)}', space=vmem, size = 0x12000, scoped, tag = 'internal scratch']
  #allocation2 [shape = 'f32[1]{0:T(128)S(6)}', space=smem, size = 0x200, scoped, tag = 'scoped memory for tpu_custom_call.1']
  %s0 = inlined_call_operand.vmem [shape: f32[2], index: 0, kind: input, shape index: {}]
  %s1 = inlined_call_operand.<no memory space> [shape: f32[1], index: 1, kind: input, shape index: {}]
  %s2 = inlined_call_operand.hbm [shape: f32[16,128], index: 2, kind: input, shape index: {}]
  %s3 = inlined_call_operand.hbm [shape: f32[8,128], index: 3, kind: output, shape index: {}]
  %s4 = sld [smem:[#allocation0]]
  $region30: #{tpu_custom_call.1} parent=0
    _
  %s6 = ssub.s32 1, %s4
  %s7 = scalar_select 0, %s6, %s4
  %8 = sst [smem:[#allocation2]] %s1
  $region1: #{tpu_custom_call.1} parent=0
    #allocation3 [shape = 'u8[512]{0}', space=smem, size = 0x200, scoped, tag = 'input window, operand 0, single buffered']
    #allocation4 [shape = 's32[1]{0}', space=sflag, size = 0x4, scoped, tag = 'scoped memory for tpu_custom_call.1']
    #allocation5 [shape = 's32[1]{0}', space=sflag, size = 0x4, scoped, tag = 'scoped memory for tpu_custom_call.1']
    #allocation6 [shape = 's32[1]{0}', space=sflag, size = 0x4, scoped, tag = 'scoped memory for tpu_custom_call.1']
    #allocation7 [shape = 'u8[8192]{0}', space=vmem, size = 0x2000, scoped, tag = 'input window, operand 2, single buffered']
    #allocation8 [shape = 'u8[4096]{0}', space=vmem, size = 0x1000, scoped, tag = 'output window, operand 0, single buffered']
    %9 = vsyncpa [#allocation6], 0
    %10 = vsyncpa [#allocation4], 0
    %11 = vsyncpa [#allocation5], 0
    // Predicated region
    $region2: #{tpu_custom_call.1} parent=1 // pred_check
      _
    $region3: #{tpu_custom_call.1} parent=1 // pred_check_branch
      %13 = sbr.rel (0) target = $region5
    $region4: #{tpu_custom_call.1} parent=1 // pred_region
      %s15 = ssub.s32 16, 16
      %16 = vsyncadd [#allocation6], %s15
      %s18 = sshll.u32 %s0, 4
      %s19 = int_to_ptr.vmem [resolvable:$true] %s18
      %21 = dma.vmem_to_smem %s19, 16, [#allocation3], [#allocation6]
    $region5: #{tpu_custom_call.1} parent=1 // pred_fallthru
      _
    // Predicated region
    $region6: #{tpu_custom_call.1} parent=1 // pred_check
      _
    $region7: #{tpu_custom_call.1} parent=1 // pred_check_branch
      %23 = sbr.rel (0) target = $region9
    $region8: #{tpu_custom_call.1} parent=1 // pred_region
      _
    $region9: #{tpu_custom_call.1} parent=1 // pred_fallthru
      _
    // Predicated region
    $region10: #{tpu_custom_call.1} parent=1 // pred_check
      _
    $region11: #{tpu_custom_call.1} parent=1 // pred_check_branch
      %25 = sbr.rel (0) target = $region13
    $region12: #{tpu_custom_call.1} parent=1 // pred_region
      %s27 = ssub.s32 256, 256
      %28 = vsyncadd [#allocation4], %s27
      %s29 = sshll.u32 [#allocation7], 4
      %s30 = int_to_ptr.vmem [resolvable:$true] %s29
      %35 = dma.hbm_to_vmem [thread:$0]  %s2, 256, %s30, [#allocation4], 128, 128, 8
    $region13: #{tpu_custom_call.1} parent=1 // pred_fallthru
      _
    // Predicated region
    $region14: #{tpu_custom_call.1} parent=1 // pred_check
      _
    $region15: #{tpu_custom_call.1} parent=1 // pred_check_branch
      %37 = sbr.rel (0) target = $region17
    $region16: #{tpu_custom_call.1} parent=1 // pred_region
      %38 = dma.done [#allocation6], 16
    $region17: #{tpu_custom_call.1} parent=1 // pred_fallthru
      _
    // Predicated region
    $region18: #{tpu_custom_call.1} parent=1 // pred_check
      _
    $region19: #{tpu_custom_call.1} parent=1 // pred_check_branch
      %40 = sbr.rel (0) target = $region21
    $region20: #{tpu_custom_call.1} parent=1 // pred_region
      %41 = dma.done [#allocation4], 256
    $region21: #{tpu_custom_call.1} parent=1 // pred_fallthru
      _
    %42 = sfence
    %v43 = vld [vmem:[#allocation7] sm:$0xff]
    %v44 = vld [vmem:[#allocation7 + $0x8] sm:$0xff]
    %v45 = vmax.f32 %v43, 0.0
    %v46 = vmax.f32 %v44, 0.0
    %s47 = sld [smem:[#allocation3]]
    %v48 = vstv %s47
    %v49 = vmul.f32 %v48, %v45
    %s50 = sld [smem:[#allocation3 + $0x1]]
    %v51 = vstv %s50
    %v52 = vmul.f32 %v51, %v46
    %v53 = vadd.f32 %v49, %v52
    %s54 = sld [smem:[#allocation2]]
    %v55 = vstv %s54
    %v56 = vadd.f32 %v53, %v55
    %57 = vst [vmem:[#allocation8] sm:$0xff] %v56
    // Predicated region
    $region22: #{tpu_custom_call.1} parent=1 // pred_check
      _
    $region23: #{tpu_custom_call.1} parent=1 // pred_check_branch
      %59 = sbr.rel (0) target = $region25
    $region24: #{tpu_custom_call.1} parent=1 // pred_region
      %s61 = ssub.s32 128, 128
      %62 = vsyncadd [#allocation5], %s61
      %s64 = sshll.u32 [#allocation8], 4
      %s65 = int_to_ptr.vmem [resolvable:$true] %s64
      %67 = dma.vmem_to_hbm [thread:$0]  %s65, 128, %s3, [#allocation5]
    $region25: #{tpu_custom_call.1} parent=1 // pred_fallthru
      _
    // Predicated region
    $region26: #{tpu_custom_call.1} parent=1 // pred_check
      _
    $region27: #{tpu_custom_call.1} parent=1 // pred_check_branch
      %69 = sbr.rel (0) target = $region29
    $region28: #{tpu_custom_call.1} parent=1 // pred_region
      %70 = dma.done [#allocation5], 128
    $region29: #{tpu_custom_call.1} parent=1 // pred_fallthru
      _
    %71 = vsyncpa [#allocation4], 1
    %72 = vsyncpa [#allocation5], 1
    %73 = vsyncpa [#allocation6], 1

</llo_original>
